<compile_context>
chip_gen: v7x
topology: tpu7x:2x2x1
jax: 0.10.0
libtpu: 0.0.40
codegen_flags: <defaults>
</compile_context>

<pallas_src>
import math

import jax
import jax.numpy as jnp
from jax import lax
from jax.experimental import pallas as pl
from jax.experimental.pallas import tpu as pltpu

_LN_EPS = 1e-5


def _cdiv(a, b):
    return (a + b - 1) // b


def _round_up(x, m):
    return ((x + m - 1) // m) * m


def _vmem_capacity_bytes():
    try:
        return int(pltpu.get_tpu_info().vmem_capacity_bytes)
    except Exception:
        return 64 << 20  # conservative (v7x-sized) fallback


def _layernorm_residual(x_f32, y_f32, b2, gamma, beta, out_dtype):
    """out = LayerNorm(x + y + b2) * gamma + beta, gamma folded into scale."""
    t = x_f32 + y_f32 + b2
    mean = jnp.mean(t, axis=-1, keepdims=True)
    var = jnp.mean(jnp.square(t - mean), axis=-1, keepdims=True)
    scale = lax.rsqrt(var + _LN_EPS) * gamma
    return ((t - mean) * scale + beta).astype(out_dtype)


# ---------------------------------------------------------------------------
# Path A ("resident"): W1/W2 stay in VMEM for the whole kernel.  Single grid
# axis over M tiles; both matmuls + epilogue fused in one grid step.
# ---------------------------------------------------------------------------
def ffn_resident_kernel(x_ref, w1_ref, b1_ref, w2_ref, b2_ref, gamma_ref,
                        beta_ref, o_ref):
    x_bf = x_ref[...].astype(jnp.bfloat16)                       # (TM, d_model)
    h = jnp.dot(x_bf, w1_ref[...], preferred_element_type=jnp.float32)
    h = jnp.maximum(h + b1_ref[...], 0.0)        # relu; dropout p=0 -> identity
    y = jnp.dot(h.astype(jnp.bfloat16), w2_ref[...],
                preferred_element_type=jnp.float32)              # (TM, d_model)
    o_ref[...] = _layernorm_residual(x_ref[...].astype(jnp.float32), y,
                                     b2_ref[...], gamma_ref[...],
                                     beta_ref[...], o_ref.dtype)


# ---------------------------------------------------------------------------
# Path B (fallback): d_ff too large for resident weights -> stream d_ff chunks
# along a second ("arbitrary") grid axis with f32 VMEM accumulation.
# ---------------------------------------------------------------------------
def ffn_ktiled_kernel(x_ref, w1_ref, b1_ref, w2_ref, b2_ref, gamma_ref,
                      beta_ref, o_ref, acc_ref, xbf_ref):
    k = pl.program_id(1)

    @pl.when(k == 0)
    def _():
        acc_ref[...] = jnp.zeros_like(acc_ref)
        xbf_ref[...] = x_ref[...].astype(jnp.bfloat16)   # cast once per M tile

    h = jnp.dot(xbf_ref[...], w1_ref[...], preferred_element_type=jnp.float32)
    h = jnp.maximum(h + b1_ref[...], 0.0)
    acc_ref[...] += jnp.dot(h.astype(jnp.bfloat16), w2_ref[...],
                            preferred_element_type=jnp.float32)

    @pl.when(k == pl.num_programs(1) - 1)
    def _():
        o_ref[...] = _layernorm_residual(x_ref[...].astype(jnp.float32),
                                         acc_ref[...], b2_ref[...],
                                         gamma_ref[...], beta_ref[...],
                                         o_ref.dtype)


def _pick_tk(d_ff, tile_k_ff):
    """Largest 256-aligned (then 128-aligned) divisor of d_ff <= tile_k_ff."""
    for align in (256, 128):
        t = (min(tile_k_ff, d_ff) // align) * align
        while t >= align:
            if d_ff % t == 0:
                return t
            t -= align
    return d_ff  # no lane-aligned divisor -> single chunk


def ffn_layer(x, w1, b1, w2, b2, gamma, beta, *,
              tile_m=512, tile_k_ff=512, force_ktiled=False):
    """x: (M, d_model) f32; w1: (d_model, d_ff) bf16; w2: (d_ff, d_model) bf16;
    b1: (1, d_ff) f32; b2/gamma/beta: (1, d_model) f32."""
    M, d_model = x.shape
    d_ff = w1.shape[1]

    cap = _vmem_capacity_bytes()
    vmem_cap = (cap // 8) * 7  # leave headroom below physical VMEM

    # M tiles: 8-aligned; cap at ceil(M/2) so there are >= 2 tiles whenever M
    # allows it (keeps both TensorCores busy on v7x via the "parallel" axis).
    tm = max(8, min(tile_m, _round_up(_cdiv(M, 2), 8), _round_up(M, 8)))
    gm = _cdiv(M, tm)

    out_shape = jax.ShapeDtypeStruct((M, d_model), x.dtype)

    # ---------------- resident-weights VMEM estimate ----------------
    bytes_w = 2 * d_model * d_ff * 2            # W1 + W2 bf16, single-buffered
    resident_est = (
        bytes_w
        + 4 * tm * d_model * 4                  # x + out tiles, double-buffered
        + 2 * (d_ff + 3 * d_model) * 4          # b1, b2, gamma, beta
        + tm * d_ff * 6                         # h (f32) + h (bf16) temporaries
        + 2 * tm * d_model * 4                  # epilogue temporaries
    )
    use_resident = (not force_ktiled) and resident_est <= (vmem_cap * 3) // 4

    if use_resident:
        vmem_limit = min(vmem_cap, max(2 * resident_est, 32 << 20))
        return pl.pallas_call(
            ffn_resident_kernel,
            out_shape=out_shape,
            grid_spec=pltpu.PrefetchScalarGridSpec(
                num_scalar_prefetch=0,
                grid=(gm,),
                in_specs=[
                    pl.BlockSpec((tm, d_model), lambda i: (i, 0)),       # x
                    pl.BlockSpec((d_model, d_ff), lambda i: (0, 0),      # W1
                                 pipeline_mode=pl.Buffered(1)),
                    pl.BlockSpec((1, d_ff), lambda i: (0, 0)),           # b1
                    pl.BlockSpec((d_ff, d_model), lambda i: (0, 0),      # W2
                                 pipeline_mode=pl.Buffered(1)),
                    pl.BlockSpec((1, d_model), lambda i: (0, 0)),        # b2
                    pl.BlockSpec((1, d_model), lambda i: (0, 0)),        # gamma
                    pl.BlockSpec((1, d_model), lambda i: (0, 0)),        # beta
                ],
                out_specs=pl.BlockSpec((tm, d_model), lambda i: (i, 0)),
            ),
            compiler_params=pltpu.CompilerParams(
                dimension_semantics=("parallel",),
                vmem_limit_bytes=vmem_limit),
        )(x, w1, b1, w2, b2, gamma, beta)

    # ---------------- k-tiled fallback ----------------
    tk = _pick_tk(d_ff, tile_k_ff)
    ktiled_est = (
        4 * tm * d_model * 4                    # x + out tiles, double-buffered
        + 2 * d_model * tk * 2                  # W1 chunk (bf16)
        + 2 * tk * d_model * 2                  # W2 chunk (bf16)
        + 2 * (tk + 3 * d_model) * 4            # b1 chunk, b2, gamma, beta
        + tm * d_model * 6                      # acc (f32) + xbf (bf16) scratch
        + tm * tk * 6                           # h temporaries
    )
    vmem_limit = min(vmem_cap, max(2 * ktiled_est, 32 << 20))
    return pl.pallas_call(
        ffn_ktiled_kernel,
        out_shape=out_shape,
        grid_spec=pltpu.PrefetchScalarGridSpec(
            num_scalar_prefetch=0,
            grid=(gm, d_ff // tk),
            in_specs=[
                pl.BlockSpec((tm, d_model), lambda i, k: (i, 0)),   # x
                pl.BlockSpec((d_model, tk), lambda i, k: (0, k)),   # W1 chunk
                pl.BlockSpec((1, tk), lambda i, k: (0, k)),         # b1 chunk
                pl.BlockSpec((tk, d_model), lambda i, k: (k, 0)),   # W2 chunk
                pl.BlockSpec((1, d_model), lambda i, k: (0, 0)),    # b2
                pl.BlockSpec((1, d_model), lambda i, k: (0, 0)),    # gamma
                pl.BlockSpec((1, d_model), lambda i, k: (0, 0)),    # beta
            ],
            out_specs=pl.BlockSpec((tm, d_model), lambda i, k: (i, 0)),
            scratch_shapes=[pltpu.VMEM((tm, d_model), jnp.float32),
                            pltpu.VMEM((tm, d_model), jnp.bfloat16)],
        ),
        compiler_params=pltpu.CompilerParams(
            dimension_semantics=("parallel", "arbitrary"),
            vmem_limit_bytes=vmem_limit),
    )(x, w1, b1, w2, b2, gamma, beta)


def xavier_uniform(key, fan_in, fan_out, shape, dtype=jnp.float32):
    bound = math.sqrt(6.0 / (fan_in + fan_out))
    return jax.random.uniform(key, shape, dtype, minval=-bound, maxval=bound)


if __name__ == "__main__":
    # Small but lane-dense shapes consistent with the module.
    d_model = 128
    dim_feedforward = 512
    seq, batch = 8, 2

    key = jax.random.PRNGKey(0)
    k_x, k_w1, k_b1, k_w2, k_b2 = jax.random.split(key, 5)

    # Parameters (xavier_uniform on weights as in _reset_parameters, small
    # uniform on biases like nn.Linear default).  Weights stored transposed
    # relative to PyTorch ((in, out)) and cast to bf16 for the MXU.
    w1_f32 = xavier_uniform(k_w1, d_model, dim_feedforward,
                            (d_model, dim_feedforward))
    b1 = jax.random.uniform(k_b1, (1, dim_feedforward), jnp.float32,
                            minval=-1.0 / math.sqrt(d_model),
                            maxval=1.0 / math.sqrt(d_model))
    w2_f32 = xavier_uniform(k_w2, dim_feedforward, d_model,
                            (dim_feedforward, d_model))
    b2 = jax.random.uniform(k_b2, (1, d_model), jnp.float32,
                            minval=-1.0 / math.sqrt(dim_feedforward),
                            maxval=1.0 / math.sqrt(dim_feedforward))
    gamma = jnp.ones((1, d_model), jnp.float32)   # nn.LayerNorm weight init
    beta = jnp.zeros((1, d_model), jnp.float32)   # nn.LayerNorm bias init

    w1 = w1_f32.astype(jnp.bfloat16)
    w2 = w2_f32.astype(jnp.bfloat16)

    # Input tgt of shape (seq, batch, d_model); flatten leading dims.
    tgt = jax.random.normal(k_x, (seq, batch, d_model), jnp.float32)
    x2d = tgt.reshape(seq * batch, d_model)

    # Main path: resident weights (they easily fit in VMEM at these sizes).
    out2d = ffn_layer(x2d, w1, b1, w2, b2, gamma, beta)
    out = out2d.reshape(seq, batch, d_model)
    jax.block_until_ready(out)

    # Also exercise the k-tiled fallback path once (forced), for coverage.
    out_kt = ffn_layer(x2d, w1, b1, w2, b2, gamma, beta,
                       force_ktiled=True, tile_k_ff=256)
    jax.block_until_ready(out_kt)

    # Reference 1: mirrors the kernel's bf16-matmul / f32-accumulate numerics.
    h_ref = jnp.maximum(
        jnp.dot(x2d.astype(jnp.bfloat16), w1,
                preferred_element_type=jnp.float32) + b1, 0.0)
    y_ref = jnp.dot(h_ref.astype(jnp.bfloat16), w2,
                    preferred_element_type=jnp.float32) + b2
    t_ref = x2d + y_ref
    mu = jnp.mean(t_ref, axis=-1, keepdims=True)
    va = jnp.mean((t_ref - mu) ** 2, axis=-1, keepdims=True)
    ref = ((t_ref - mu) / jnp.sqrt(va + 1e-5)) * gamma + beta
    assert jnp.allclose(out2d, ref, atol=1e-3, rtol=1e-3), (
        float(jnp.max(jnp.abs(out2d - ref))))
    assert jnp.allclose(out_kt, ref, atol=1e-3, rtol=1e-3), (
        float(jnp.max(jnp.abs(out_kt - ref))))

    # Reference 2: full-f32 matmuls (PyTorch-style numerics) with the same
    # bf16-stored weights; loose tolerance for the bf16-operand MXU drift.
    h32 = jnp.maximum(x2d @ w1.astype(jnp.float32) + b1, 0.0)
    y32 = h32 @ w2.astype(jnp.float32) + b2
    t32 = x2d + y32
    mu32 = jnp.mean(t32, axis=-1, keepdims=True)
    va32 = jnp.mean((t32 - mu32) ** 2, axis=-1, keepdims=True)
    ref32 = ((t32 - mu32) / jnp.sqrt(va32 + 1e-5)) * gamma + beta
    assert jnp.allclose(out2d, ref32, atol=5e-2, rtol=5e-2), (
        float(jnp.max(jnp.abs(out2d - ref32))))

    print("KERNEL_OK")
</pallas_src>

<mosaic_0001>
module attributes {stable_mosaic.version = 11 : i64} {
  func.func @ffn_resident_kernel(%arg0: i32, %arg1: memref<8x128xf32, #tpu.memory_space<vmem>>, %arg2: memref<128x512xbf16, #tpu.memory_space<vmem>>, %arg3: memref<1x512xf32, #tpu.memory_space<vmem>>, %arg4: memref<512x128xbf16, #tpu.memory_space<vmem>>, %arg5: memref<1x128xf32, #tpu.memory_space<vmem>>, %arg6: memref<1x128xf32, #tpu.memory_space<vmem>>, %arg7: memref<1x128xf32, #tpu.memory_space<vmem>>, %arg8: memref<8x128xf32, #tpu.memory_space<vmem>>) attributes {dimension_semantics = [#tpu.dimension_semantics<parallel>], iteration_bounds = array<i64: 2>, scalar_prefetch = 0 : i64, scratch_operands = 0 : i64, tpu.core_type = #tpu.core_type<tc>, window_params = [{transform_indices = @transform_0, window_bounds = array<i64: 8, 128>}, {pipeline_mode = #tpu.pipeline_mode<synchronous>, transform_indices = @transform_1, window_bounds = array<i64: 128, 512>}, {pipeline_mode = #tpu.pipeline_mode<synchronous>, transform_indices = @transform_2, window_bounds = array<i64: 1, 512>}, {pipeline_mode = #tpu.pipeline_mode<synchronous>, transform_indices = @transform_3, window_bounds = array<i64: 512, 128>}, {pipeline_mode = #tpu.pipeline_mode<synchronous>, transform_indices = @transform_4, window_bounds = array<i64: 1, 128>}, {pipeline_mode = #tpu.pipeline_mode<synchronous>, transform_indices = @transform_5, window_bounds = array<i64: 1, 128>}, {pipeline_mode = #tpu.pipeline_mode<synchronous>, transform_indices = @transform_6, window_bounds = array<i64: 1, 128>}, {transform_indices = @transform_7, window_bounds = array<i64: 8, 128>}]} {
    %c0 = arith.constant 0 : index
    %c0_0 = arith.constant 0 : index
    %0 = vector.load %arg1[%c0, %c0_0] : memref<8x128xf32, #tpu.memory_space<vmem>>, vector<8x128xf32>
    %1 = arith.truncf %0 : vector<8x128xf32> to vector<8x128xbf16>
    %c0_1 = arith.constant 0 : index
    %c0_2 = arith.constant 0 : index
    %2 = vector.load %arg2[%c0_1, %c0_2] : memref<128x512xbf16, #tpu.memory_space<vmem>>, vector<128x512xbf16>
    %cst = arith.constant dense<0.000000e+00> : vector<8x512xf32>
    %3 = tpu.matmul %1, %2, %cst {dimension_numbers = #tpu.dot_dimension_numbers<[1], [0], [0], [1], [0, 0, 1, 1], [], []>} : vector<8x128xbf16>, vector<128x512xbf16>, vector<8x512xf32> -> vector<8x512xf32>
    %c0_3 = arith.constant 0 : index
    %c0_4 = arith.constant 0 : index
    %4 = vector.load %arg3[%c0_3, %c0_4] : memref<1x512xf32, #tpu.memory_space<vmem>>, vector<1x512xf32>
    %5 = vector.broadcast %4 : vector<1x512xf32> to vector<8x512xf32>
    %6 = arith.addf %3, %5 : vector<8x512xf32>
    %cst_5 = arith.constant 0.000000e+00 : f32
    %7 = vector.broadcast %cst_5 : f32 to vector<8x512xf32>
    %8 = arith.maximumf %6, %7 : vector<8x512xf32>
    %9 = arith.truncf %8 : vector<8x512xf32> to vector<8x512xbf16>
    %c0_6 = arith.constant 0 : index
    %c0_7 = arith.constant 0 : index
    %10 = vector.load %arg4[%c0_6, %c0_7] : memref<512x128xbf16, #tpu.memory_space<vmem>>, vector<512x128xbf16>
    %cst_8 = arith.constant dense<0.000000e+00> : vector<8x128xf32>
    %11 = tpu.matmul %9, %10, %cst_8 {dimension_numbers = #tpu.dot_dimension_numbers<[1], [0], [0], [1], [0, 0, 1, 1], [], []>} : vector<8x512xbf16>, vector<512x128xbf16>, vector<8x128xf32> -> vector<8x128xf32>
    %c0_9 = arith.constant 0 : index
    %c0_10 = arith.constant 0 : index
    %12 = vector.load %arg1[%c0_9, %c0_10] : memref<8x128xf32, #tpu.memory_space<vmem>>, vector<8x128xf32>
    %c0_11 = arith.constant 0 : index
    %c0_12 = arith.constant 0 : index
    %13 = vector.load %arg5[%c0_11, %c0_12] : memref<1x128xf32, #tpu.memory_space<vmem>>, vector<1x128xf32>
    %c0_13 = arith.constant 0 : index
    %c0_14 = arith.constant 0 : index
    %14 = vector.load %arg6[%c0_13, %c0_14] : memref<1x128xf32, #tpu.memory_space<vmem>>, vector<1x128xf32>
    %c0_15 = arith.constant 0 : index
    %c0_16 = arith.constant 0 : index
    %15 = vector.load %arg7[%c0_15, %c0_16] : memref<1x128xf32, #tpu.memory_space<vmem>>, vector<1x128xf32>
    %16 = arith.addf %12, %11 : vector<8x128xf32>
    %17 = vector.broadcast %13 : vector<1x128xf32> to vector<8x128xf32>
    %18 = arith.addf %16, %17 : vector<8x128xf32>
    %cst_17 = arith.constant dense<0.000000e+00> : vector<8xf32>
    %19 = vector.multi_reduction <add>, %18, %cst_17 [1] : vector<8x128xf32> to vector<8xf32>
    %20 = vector.shape_cast %19 : vector<8xf32> to vector<8x1xf32>
    %cst_18 = arith.constant 1.280000e+02 : f32
    %21 = vector.broadcast %cst_18 : f32 to vector<8x1xf32>
    %22 = arith.divf %20, %21 : vector<8x1xf32>
    %23 = vector.broadcast %22 : vector<8x1xf32> to vector<8x128xf32>
    %24 = arith.subf %18, %23 : vector<8x128xf32>
    %25 = arith.mulf %24, %24 : vector<8x128xf32>
    %cst_19 = arith.constant dense<0.000000e+00> : vector<8xf32>
    %26 = vector.multi_reduction <add>, %25, %cst_19 [1] : vector<8x128xf32> to vector<8xf32>
    %27 = vector.shape_cast %26 : vector<8xf32> to vector<8x1xf32>
    %cst_20 = arith.constant 1.280000e+02 : f32
    %28 = vector.broadcast %cst_20 : f32 to vector<8x1xf32>
    %29 = arith.divf %27, %28 : vector<8x1xf32>
    %cst_21 = arith.constant 9.99999974E-6 : f32
    %30 = vector.broadcast %cst_21 : f32 to vector<8x1xf32>
    %31 = arith.addf %29, %30 : vector<8x1xf32>
    %32 = math.rsqrt %31 : vector<8x1xf32>
    %33 = vector.broadcast %32 : vector<8x1xf32> to vector<8x128xf32>
    %34 = vector.broadcast %14 : vector<1x128xf32> to vector<8x128xf32>
    %35 = arith.mulf %33, %34 : vector<8x128xf32>
    %36 = vector.broadcast %22 : vector<8x1xf32> to vector<8x128xf32>
    %37 = arith.subf %18, %36 : vector<8x128xf32>
    %38 = arith.mulf %37, %35 : vector<8x128xf32>
    %39 = vector.broadcast %15 : vector<1x128xf32> to vector<8x128xf32>
    %40 = arith.addf %38, %39 : vector<8x128xf32>
    %c0_22 = arith.constant 0 : index
    %c0_23 = arith.constant 0 : index
    %41 = vector.load %arg8[%c0_22, %c0_23] : memref<8x128xf32, #tpu.memory_space<vmem>>, vector<8x128xf32>
    tpu.vector_store %arg8[%c0_22, %c0_23], %40 {strides = array<i32>} : memref<8x128xf32, #tpu.memory_space<vmem>>, vector<8x128xf32>,
    return
  }
  func.func @transform_0(%arg0: i32) -> (i32, i32) {
    %c0_i32 = arith.constant 0 : i32
    %c0_i32_0 = arith.constant 0 : i32
    return %arg0, %c0_i32 : i32, i32
  }
  func.func @transform_1(%arg0: i32) -> (i32, i32) {
    %c0_i32 = arith.constant 0 : i32
    %c0_i32_0 = arith.constant 0 : i32
    %c0_i32_1 = arith.constant 0 : i32
    return %c0_i32, %c0_i32_0 : i32, i32
  }
  func.func @transform_2(%arg0: i32) -> (i32, i32) {
    %c0_i32 = arith.constant 0 : i32
    %c0_i32_0 = arith.constant 0 : i32
    %c0_i32_1 = arith.constant 0 : i32
    return %c0_i32, %c0_i32_0 : i32, i32
  }
  func.func @transform_3(%arg0: i32) -> (i32, i32) {
    %c0_i32 = arith.constant 0 : i32
    %c0_i32_0 = arith.constant 0 : i32
    %c0_i32_1 = arith.constant 0 : i32
    return %c0_i32, %c0_i32_0 : i32, i32
  }
  func.func @transform_4(%arg0: i32) -> (i32, i32) {
    %c0_i32 = arith.constant 0 : i32
    %c0_i32_0 = arith.constant 0 : i32
    %c0_i32_1 = arith.constant 0 : i32
    return %c0_i32, %c0_i32_0 : i32, i32
  }
  func.func @transform_5(%arg0: i32) -> (i32, i32) {
    %c0_i32 = arith.constant 0 : i32
    %c0_i32_0 = arith.constant 0 : i32
    %c0_i32_1 = arith.constant 0 : i32
    return %c0_i32, %c0_i32_0 : i32, i32
  }
  func.func @transform_6(%arg0: i32) -> (i32, i32) {
    %c0_i32 = arith.constant 0 : i32
    %c0_i32_0 = arith.constant 0 : i32
    %c0_i32_1 = arith.constant 0 : i32
    return %c0_i32, %c0_i32_0 : i32, i32
  }
  func.func @transform_7(%arg0: i32) -> (i32, i32) {
    %c0_i32 = arith.constant 0 : i32
    %c0_i32_0 = arith.constant 0 : i32
    return %arg0, %c0_i32 : i32, i32
  }
}

</mosaic_0001>

<llo_original>
// kernel: tpu_custom_call.1
$region0: #{tpu_custom_call.1}
  #allocation0 [shape = 'u32[]', space=smem, size = 0x4, offset = 0x4, fixed_abs, tag = 'smem constant byte address 0x4 - core index']
  #allocation1 [shape = 'u32[144,128]{1,0:T(1,128)}', space=vmem, size = 0x12000, scoped, tag = 'internal scratch']
  %s0 = inlined_call_operand.hbm [shape: f32[16,128], index: 0, kind: input, shape index: {}]
  %s1 = inlined_call_operand.hbm [shape: bf16[128,512], index: 1, kind: input, shape index: {}]
  %s2 = inlined_call_operand.vmem [shape: f32[1,512], index: 2, kind: input, shape index: {}]
  %s3 = inlined_call_operand.hbm [shape: bf16[512,128], index: 3, kind: input, shape index: {}]
  %s4 = inlined_call_operand.vmem [shape: f32[1,128], index: 4, kind: input, shape index: {}]
  %s5 = inlined_call_operand.vmem [shape: f32[1,128], index: 5, kind: input, shape index: {}]
  %s6 = inlined_call_operand.vmem [shape: f32[1,128], index: 6, kind: input, shape index: {}]
  %s7 = inlined_call_operand.hbm [shape: f32[16,128], index: 7, kind: output, shape index: {}]
  %s8 = sld [smem:[#allocation0]]
  $region73: #{tpu_custom_call.1} parent=0
    _
  %s10 = ssub.s32 1, %s8
  %s11 = scalar_select 0, %s10, %s8
  $region1: #{tpu_custom_call.1} parent=0
    #allocation2 [shape = 'u8[8192]{0}', space=vmem, size = 0x2000, scoped, tag = 'input window, operand 0']
    #allocation3 [shape = 's32[2]{0}', space=sflag, size = 0x8, scoped, tag = 'scoped memory for tpu_custom_call.1']
    #allocation4 [shape = 's32[2]{0}', space=sflag, size = 0x8, scoped, tag = 'scoped memory for tpu_custom_call.1']
    #allocation5 [shape = 'u8[131072]{0}', space=vmem, size = 0x20000, scoped, tag = 'input window, operand 1, single buffered']
    #allocation6 [shape = 's32[1]{0}', space=sflag, size = 0x4, scoped, tag = 'scoped memory for tpu_custom_call.1']
    #allocation7 [shape = 'u8[131072]{0}', space=vmem, size = 0x20000, scoped, tag = 'input window, operand 3, single buffered']
    #allocation8 [shape = 'u8[8192]{0}', space=vmem, size = 0x2000, scoped, tag = 'output window, operand 0']
    %12 = vsyncpa [#allocation3], 0
    %s13 = scalar_lea.sflag [#allocation3], 1
    %14 = vsyncpa %s13, 0
    %15 = vsyncpa [#allocation6], 0
    %16 = vsyncpa [#allocation4], 0
    %s17 = scalar_lea.sflag [#allocation4], 1
    %18 = vsyncpa %s17, 0
    loop: start=0, step=1, limit=4
    $region2: #{tpu_custom_call.1} parent=1 // loop_pre_header
      _
    $region3: #{tpu_custom_call.1} parent=1 // loop_header
      %s20 = sphi 0, %s24
      %p21 = scmp.ge.s32.totalorder %s20, 4
      %s30 = sphi 0, %s32
      %s33 = sphi 0, %s30
      %s34 = sphi 0, %s33
      %s50 = sphi 0, %s34
      %s54 = sphi 0, %s54
      %s56 = sphi 0, %s54
      %s57 = sphi 0, %s56
      %s71 = sphi 0, %s57
      %s75 = sphi 0, %s75
      %s77 = sphi 0, %s75
      %s78 = sphi 0, %s77
      %s92 = sphi 0, %s78
      %s96 = sphi 0, %s96
      %s98 = sphi 0, %s96
      %s99 = sphi 0, %s98
      %s113 = sphi 0, %s99
      %s117 = sphi 0, %s117
      %s119 = sphi 0, %s117
      %s120 = sphi 0, %s119
      %s134 = sphi 0, %s120
      %s138 = sphi 0, %s138
      %s140 = sphi 0, %s138
      %s141 = sphi 0, %s140
      %s155 = sphi 0, %s141
      %s159 = sphi 0, %s159
      %s161 = sphi 0, %s159
      %s162 = sphi 0, %s161
      %s176 = sphi 0, %s162
      %s182 = sphi 0, %s184
      %s185 = sphi 0, %s182
      %s186 = sphi 0, %s185
      %s202 = sphi 0, %s186
    $region4: #{tpu_custom_call.1} parent=1 // loop_header_branch
      %23 = sbr.rel (%p21) target = $region8
    $region5: #{tpu_custom_call.1} parent=1 // loop_body
      %s25 = ssub.s32 %s20, 1
      %s26 = ssub.s32 %s20, 2
      %s27 = sadd.s32 %s20, 1
      %s28 = ssub.s32 %s20, %s27
      %p29 = scmp.eq.s32.totalorder %s28, 0
      %s31 = sadd.s32 %s30, 1
      %s32 = scalar_select %p29, %s30, %s31
      %p35 = pneg %p29
      %p36 = scmp.eq.s32.totalorder %s20, 1
      %p37 = por %p35, %p36
      %p38 = scmp.ne.s32.totalorder %s30, %s33
      %p39 = scmp.eq.s32.totalorder %s20, 0
      %p40 = por %p38, %p39
      %p41 = scmp.ne.s32.totalorder %s30, %s33
      %p42 = scmp.eq.s32.totalorder %s25, 1
      %p43 = por %p41, %p42
      %p44 = scmp.ne.s32.totalorder %s33, %s34
      %p45 = scmp.eq.s32.totalorder %s25, 0
      %p46 = por %p44, %p45
      %p47 = scmp.ne.s32.totalorder %s33, %s34
      %p48 = scmp.eq.s32.totalorder %s26, 1
      %p49 = por %p47, %p48
      %p51 = scmp.ne.s32.totalorder %s34, %s50
      %p52 = scmp.eq.s32.totalorder %s26, 0
      %p53 = por %p51, %p52
      %s55 = sadd.s32 %s54, 1
      %p58 = scmp.eq.s32.totalorder %s20, 1
      %p59 = scmp.ne.s32.totalorder %s54, %s56
      %p60 = scmp.eq.s32.totalorder %s20, 0
      %p61 = por %p59, %p60
      %p62 = scmp.ne.s32.totalorder %s54, %s56
      %p63 = scmp.eq.s32.totalorder %s25, 1
      %p64 = por %p62, %p63
      %p65 = scmp.ne.s32.totalorder %s56, %s57
      %p66 = scmp.eq.s32.totalorder %s25, 0
      %p67 = por %p65, %p66
      %p68 = scmp.ne.s32.totalorder %s56, %s57
      %p69 = scmp.eq.s32.totalorder %s26, 1
      %p70 = por %p68, %p69
      %p72 = scmp.ne.s32.totalorder %s57, %s71
      %p73 = scmp.eq.s32.totalorder %s26, 0
      %p74 = por %p72, %p73
      %s76 = sadd.s32 %s75, 1
      %p79 = scmp.eq.s32.totalorder %s20, 1
      %p80 = scmp.ne.s32.totalorder %s75, %s77
      %p81 = scmp.eq.s32.totalorder %s20, 0
      %p82 = por %p80, %p81
      %p83 = scmp.ne.s32.totalorder %s75, %s77
      %p84 = scmp.eq.s32.totalorder %s25, 1
      %p85 = por %p83, %p84
      %p86 = scmp.ne.s32.totalorder %s77, %s78
      %p87 = scmp.eq.s32.totalorder %s25, 0
      %p88 = por %p86, %p87
      %p89 = scmp.ne.s32.totalorder %s77, %s78
      %p90 = scmp.eq.s32.totalorder %s26, 1
      %p91 = por %p89, %p90
      %p93 = scmp.ne.s32.totalorder %s78, %s92
      %p94 = scmp.eq.s32.totalorder %s26, 0
      %p95 = por %p93, %p94
      %s97 = sadd.s32 %s96, 1
      %p100 = scmp.eq.s32.totalorder %s20, 1
      %p101 = scmp.ne.s32.totalorder %s96, %s98
      %p102 = scmp.eq.s32.totalorder %s20, 0
      %p103 = por %p101, %p102
      %p104 = scmp.ne.s32.totalorder %s96, %s98
      %p105 = scmp.eq.s32.totalorder %s25, 1
      %p106 = por %p104, %p105
      %p107 = scmp.ne.s32.totalorder %s98, %s99
      %p108 = scmp.eq.s32.totalorder %s25, 0
      %p109 = por %p107, %p108
      %p110 = scmp.ne.s32.totalorder %s98, %s99
      %p111 = scmp.eq.s32.totalorder %s26, 1
      %p112 = por %p110, %p111
      %p114 = scmp.ne.s32.totalorder %s99, %s113
      %p115 = scmp.eq.s32.totalorder %s26, 0
      %p116 = por %p114, %p115
      %s118 = sadd.s32 %s117, 1
      %p121 = scmp.eq.s32.totalorder %s20, 1
      %p122 = scmp.ne.s32.totalorder %s117, %s119
      %p123 = scmp.eq.s32.totalorder %s20, 0
      %p124 = por %p122, %p123
      %p125 = scmp.ne.s32.totalorder %s117, %s119
      %p126 = scmp.eq.s32.totalorder %s25, 1
      %p127 = por %p125, %p126
      %p128 = scmp.ne.s32.totalorder %s119, %s120
      %p129 = scmp.eq.s32.totalorder %s25, 0
      %p130 = por %p128, %p129
      %p131 = scmp.ne.s32.totalorder %s119, %s120
      %p132 = scmp.eq.s32.totalorder %s26, 1
      %p133 = por %p131, %p132
      %p135 = scmp.ne.s32.totalorder %s120, %s134
      %p136 = scmp.eq.s32.totalorder %s26, 0
      %p137 = por %p135, %p136
      %s139 = sadd.s32 %s138, 1
      %p142 = scmp.eq.s32.totalorder %s20, 1
      %p143 = scmp.ne.s32.totalorder %s138, %s140
      %p144 = scmp.eq.s32.totalorder %s20, 0
      %p145 = por %p143, %p144
      %p146 = scmp.ne.s32.totalorder %s138, %s140
      %p147 = scmp.eq.s32.totalorder %s25, 1
      %p148 = por %p146, %p147
      %p149 = scmp.ne.s32.totalorder %s140, %s141
      %p150 = scmp.eq.s32.totalorder %s25, 0
      %p151 = por %p149, %p150
      %p152 = scmp.ne.s32.totalorder %s140, %s141
      %p153 = scmp.eq.s32.totalorder %s26, 1
      %p154 = por %p152, %p153
      %p156 = scmp.ne.s32.totalorder %s141, %s155
      %p157 = scmp.eq.s32.totalorder %s26, 0
      %p158 = por %p156, %p157
      %s160 = sadd.s32 %s159, 1
      %p163 = scmp.eq.s32.totalorder %s20, 1
      %p164 = scmp.ne.s32.totalorder %s159, %s161
      %p165 = scmp.eq.s32.totalorder %s20, 0
      %p166 = por %p164, %p165
      %p167 = scmp.ne.s32.totalorder %s159, %s161
      %p168 = scmp.eq.s32.totalorder %s25, 1
      %p169 = por %p167, %p168
      %p170 = scmp.ne.s32.totalorder %s161, %s162
      %p171 = scmp.eq.s32.totalorder %s25, 0
      %p172 = por %p170, %p171
      %p173 = scmp.ne.s32.totalorder %s161, %s162
      %p174 = scmp.eq.s32.totalorder %s26, 1
      %p175 = por %p173, %p174
      %p177 = scmp.ne.s32.totalorder %s162, %s176
      %p178 = scmp.eq.s32.totalorder %s26, 0
      %p179 = por %p177, %p178
      %s180 = ssub.s32 %s20, %s27
      %p181 = scmp.eq.s32.totalorder %s180, 0
      %s183 = sadd.s32 %s182, 1
      %s184 = scalar_select %p181, %s182, %s183
      %p187 = pneg %p181
      %p188 = scmp.eq.s32.totalorder %s20, 1
      %p189 = por %p187, %p188
      %p190 = scmp.ne.s32.totalorder %s182, %s185
      %p191 = scmp.eq.s32.totalorder %s20, 0
      %p192 = por %p190, %p191
      %p193 = scmp.ne.s32.totalorder %s182, %s185
      %p194 = scmp.eq.s32.totalorder %s25, 1
      %p195 = por %p193, %p194
      %p196 = scmp.ne.s32.totalorder %s185, %s186
      %p197 = scmp.eq.s32.totalorder %s25, 0
      %p198 = por %p196, %p197
      %p199 = scmp.ne.s32.totalorder %s185, %s186
      %p200 = scmp.eq.s32.totalorder %s26, 1
      %p201 = por %p199, %p200
      %p203 = scmp.ne.s32.totalorder %s186, %s202
      %p204 = scmp.eq.s32.totalorder %s26, 0
      %p205 = por %p203, %p204
      %p206 = scmp.le.s32.totalorder 1, %s20
      %p207 = scmp.lt.s32.totalorder %s20, 3
      %p208 = pnand %p206, %p207
      %p209 = pneg %p208
      // Predicated region
      $region9: #{tpu_custom_call.1} parent=5 // pred_check
        _
      $region10: #{tpu_custom_call.1} parent=5 // pred_check_branch
        %211 = sbr.rel (%p208) target = $region12
      $region11: #{tpu_custom_call.1} parent=5 // pred_region
        %s212 = ssub.s32 %s20, 1
        // Predicated region
        $region13: #{tpu_custom_call.1} parent=11 // pred_check
          %p213 = pneg %p67
        $region14: #{tpu_custom_call.1} parent=11 // pred_check_branch
          %215 = sbr.rel (%p213) target = $region16
        $region15: #{tpu_custom_call.1} parent=11 // pred_region
          %s217 = ssub.s32 4096, 4096
          %218 = vsyncadd [#allocation6], %s217
          %s219 = sshll.u32 [#allocation5], 4
          %s220 = int_to_ptr.vmem [resolvable:$true] %s219
          %225 = dma.hbm_to_vmem [thread:$0]  %s1, 4096, %s220, [#allocation6], 256, 256, 16
        $region16: #{tpu_custom_call.1} parent=11 // pred_fallthru
          _
        // Predicated region
        $region17: #{tpu_custom_call.1} parent=11 // pred_check
          %p226 = pneg %p88
        $region18: #{tpu_custom_call.1} parent=11 // pred_check_branch
          %228 = sbr.rel (%p226) target = $region20
        $region19: #{tpu_custom_call.1} parent=11 // pred_region
          _
        $region20: #{tpu_custom_call.1} parent=11 // pred_fallthru
          _
        // Predicated region
        $region21: #{tpu_custom_call.1} parent=11 // pred_check
          %p229 = pneg %p109
        $region22: #{tpu_custom_call.1} parent=11 // pred_check_branch
          %231 = sbr.rel (%p229) target = $region24
        $region23: #{tpu_custom_call.1} parent=11 // pred_region
          %s233 = ssub.s32 4096, 4096
          %234 = vsyncadd [#allocation6], %s233
          %s235 = sshll.u32 [#allocation7], 4
          %s236 = int_to_ptr.vmem [resolvable:$true] %s235
          %241 = dma.hbm_to_vmem [thread:$0]  %s3, 4096, %s236, [#allocation6], 64, 64, 4
        $region24: #{tpu_custom_call.1} parent=11 // pred_fallthru
          _
        // Predicated region
        $region25: #{tpu_custom_call.1} parent=11 // pred_check
          %p242 = pneg %p130
        $region26: #{tpu_custom_call.1} parent=11 // pred_check_branch
          %244 = sbr.rel (%p242) target = $region28
        $region27: #{tpu_custom_call.1} parent=11 // pred_region
          _
        $region28: #{tpu_custom_call.1} parent=11 // pred_fallthru
          _
        // Predicated region
        $region29: #{tpu_custom_call.1} parent=11 // pred_check
          %p245 = pneg %p151
        $region30: #{tpu_custom_call.1} parent=11 // pred_check_branch
          %247 = sbr.rel (%p245) target = $region32
        $region31: #{tpu_custom_call.1} parent=11 // pred_region
          _
        $region32: #{tpu_custom_call.1} parent=11 // pred_fallthru
          _
        // Predicated region
        $region33: #{tpu_custom_call.1} parent=11 // pred_check
          %p248 = pneg %p172
        $region34: #{tpu_custom_call.1} parent=11 // pred_check_branch
          %250 = sbr.rel (%p248) target = $region36
        $region35: #{tpu_custom_call.1} parent=11 // pred_region
          _
        $region36: #{tpu_custom_call.1} parent=11 // pred_fallthru
          _
      $region12: #{tpu_custom_call.1} parent=5 // pred_fallthru
        _
      %p251 = scmp.lt.s32.totalorder %s20, 2
      // Predicated region
      $region37: #{tpu_custom_call.1} parent=5 // pred_check
        %p252 = pneg %p251
      $region38: #{tpu_custom_call.1} parent=5 // pred_check_branch
        %254 = sbr.rel (%p252) target = $region40
      $region39: #{tpu_custom_call.1} parent=5 // pred_region
        // Predicated region
        $region41: #{tpu_custom_call.1} parent=39 // pred_check
          %p255 = pneg %p40
        $region42: #{tpu_custom_call.1} parent=39 // pred_check_branch
          %257 = sbr.rel (%p255) target = $region44
        $region43: #{tpu_custom_call.1} parent=39 // pred_region
          %s258 = sand.u32 %s30, 1
          %s259 = scalar_lea.sflag [#allocation3], %s258
          %s260 = sand.u32 %s30, 1
          %s261 = smul.addr %s260, 8
          %s262 = scalar_lea.vmem [#allocation2], %s261
          %s264 = ssub.s32 128, 128
          %265 = vsyncadd %s259, %s264
          %s266 = smul.addr %s20, 128
          %s267 = scalar_lea.hbm %s0, %s266
          %s269 = sshll.u32 %s262, 4
          %s270 = int_to_ptr.vmem [resolvable:$true] %s269
          %272 = dma.hbm_to_vmem [thread:$0]  %s267, 128, %s270, %s259
        $region44: #{tpu_custom_call.1} parent=39 // pred_fallthru
          _
      $region40: #{tpu_custom_call.1} parent=5 // pred_fallthru
        _
      %p273 = scmp.le.s32.totalorder 1, %s20
      %p274 = scmp.lt.s32.totalorder %s20, 3
      %p275 = pnand %p273, %p274
      %p276 = pneg %p275
      // Predicated region
      $region45: #{tpu_custom_call.1} parent=5 // pred_check
        _
      $region46: #{tpu_custom_call.1} parent=5 // pred_check_branch
        %278 = sbr.rel (%p275) target = $region48
      $region47: #{tpu_custom_call.1} parent=5 // pred_region
        %s279 = ssub.s32 %s20, 1
        %s280 = sand.u32 %s33, 1
        %s281 = scalar_lea.sflag [#allocation3], %s280
        %s282 = sand.u32 %s33, 1
        %s283 = smul.addr %s282, 8
        %s284 = scalar_lea.vmem [#allocation2], %s283
        // Predicated region
        $region49: #{tpu_custom_call.1} parent=47 // pred_check
          %p285 = pneg %p46
        $region50: #{tpu_custom_call.1} parent=47 // pred_check_branch
          %287 = sbr.rel (%p285) target = $region52
        $region51: #{tpu_custom_call.1} parent=47 // pred_region
          %288 = dma.done %s281, 128
        $region52: #{tpu_custom_call.1} parent=47 // pred_fallthru
          _
        // Predicated region
        $region53: #{tpu_custom_call.1} parent=47 // pred_check
          %p289 = pneg %p67
        $region54: #{tpu_custom_call.1} parent=47 // pred_check_branch
          %291 = sbr.rel (%p289) target = $region56
        $region55: #{tpu_custom_call.1} parent=47 // pred_region
          %292 = dma.done [#allocation6], 4096
        $region56: #{tpu_custom_call.1} parent=47 // pred_fallthru
          _
        // Predicated region
        $region57: #{tpu_custom_call.1} parent=47 // pred_check
          %p293 = pneg %p109
        $region58: #{tpu_custom_call.1} parent=47 // pred_check_branch
          %295 = sbr.rel (%p293) target = $region60
        $region59: #{tpu_custom_call.1} parent=47 // pred_region
          %296 = dma.done [#allocation6], 4096
        $region60: #{tpu_custom_call.1} parent=47 // pred_fallthru
          _
        %s297 = sand.u32 %s33, 1
        %s298 = scalar_lea.sflag [#allocation3], %s297
        %s299 = sand.u32 %s33, 1
        %s300 = smul.addr %s299, 8
        %s301 = scalar_lea.vmem [#allocation2], %s300
        %p302 = pneg %p46
        %p303 = pneg %p43
        %p304 = pneg %p67
        %p305 = pneg %p64
        %p306 = pneg %p88
        %p307 = pneg %p85
        %p308 = pneg %p109
        %p309 = pneg %p106
        %p310 = pneg %p130
        %p311 = pneg %p127
        %p312 = pneg %p151
        %p313 = pneg %p148
        %p314 = pneg %p172
        %p315 = pneg %p169
        %p316 = pneg %p198
        %p317 = pneg %p195
        %s318 = sand.u32 %s185, 1
        %s319 = scalar_lea.sflag [#allocation4], %s318
        %s320 = sand.u32 %s185, 1
        %s321 = smul.addr %s320, 8
        %s322 = scalar_lea.vmem [#allocation8], %s321
        %v324 = vld [vmem:[%s284] sm:$0xff]
        %v325 = vpack.c.bf16 %v324, %v324
        %v326 = vld [vmem:[#allocation5] sm:$0xff]
        %v327 = vld [vmem:[#allocation5 + $0x8] sm:$0xff]
        %v328 = vld [vmem:[#allocation5 + $0x10] sm:$0xff]
        %v329 = vld [vmem:[#allocation5 + $0x18] sm:$0xff]
        %v330 = vld [vmem:[#allocation5 + $0x20] sm:$0xff]
        %v331 = vld [vmem:[#allocation5 + $0x28] sm:$0xff]
        %v332 = vld [vmem:[#allocation5 + $0x30] sm:$0xff]
        %v333 = vld [vmem:[#allocation5 + $0x38] sm:$0xff]
        %v334 = vld [vmem:[#allocation5 + $0x40] sm:$0xff]
        %v335 = vld [vmem:[#allocation5 + $0x48] sm:$0xff]
        %v336 = vld [vmem:[#allocation5 + $0x50] sm:$0xff]
        %v337 = vld [vmem:[#allocation5 + $0x58] sm:$0xff]
        %v338 = vld [vmem:[#allocation5 + $0x60] sm:$0xff]
        %v339 = vld [vmem:[#allocation5 + $0x68] sm:$0xff]
        %v340 = vld [vmem:[#allocation5 + $0x70] sm:$0xff]
        %v341 = vld [vmem:[#allocation5 + $0x78] sm:$0xff]
        %v342 = vld [vmem:[#allocation5 + $0x80] sm:$0xff]
        %v343 = vld [vmem:[#allocation5 + $0x88] sm:$0xff]
        %v344 = vld [vmem:[#allocation5 + $0x90] sm:$0xff]
        %v345 = vld [vmem:[#allocation5 + $0x98] sm:$0xff]
        %v346 = vld [vmem:[#allocation5 + $0xa0] sm:$0xff]
        %v347 = vld [vmem:[#allocation5 + $0xa8] sm:$0xff]
        %v348 = vld [vmem:[#allocation5 + $0xb0] sm:$0xff]
        %v349 = vld [vmem:[#allocation5 + $0xb8] sm:$0xff]
        %v350 = vld [vmem:[#allocation5 + $0xc0] sm:$0xff]
        %v351 = vld [vmem:[#allocation5 + $0xc8] sm:$0xff]
        %v352 = vld [vmem:[#allocation5 + $0xd0] sm:$0xff]
        %v353 = vld [vmem:[#allocation5 + $0xd8] sm:$0xff]
        %v354 = vld [vmem:[#allocation5 + $0xe0] sm:$0xff]
        %v355 = vld [vmem:[#allocation5 + $0xe8] sm:$0xff]
        %v356 = vld [vmem:[#allocation5 + $0xf0] sm:$0xff]
        %v357 = vld [vmem:[#allocation5 + $0xf8] sm:$0xff]
        %v358 = vld [vmem:[%s2] sm:$0xf]
        %v360 = vlaneseq
        %v361 = vshrl.u32 %v360, 7
        %v362 = vsub.s32 0, %v361
        %v363 = vrot.slane %v358, %v362
        %v364 = vlaneseq
        %v365 = vshrl.u32 %v364, 7
        %v366 = vsub.s32 1, %v365
        %v367 = vrot.slane %v358, %v366
        %v368 = vlaneseq
        %v369 = vshrl.u32 %v368, 7
        %v370 = vsub.s32 2, %v369
        %v371 = vrot.slane %v358, %v370
        %v372 = vlaneseq
        %v373 = vshrl.u32 %v372, 7
        %v374 = vsub.s32 3, %v373
        %v375 = vrot.slane %v358, %v374
        %v412 = vunpack.c.l.b16 %v326
        %v413 = vunpack.c.h.b16 %v326
        %v414 = vunpack.c.l.b16 %v327
        %v415 = vunpack.c.h.b16 %v327
        %v416 = vunpack.c.l.b16 %v328
        %v417 = vunpack.c.h.b16 %v328
        %v418 = vunpack.c.l.b16 %v329
        %v419 = vunpack.c.h.b16 %v329
        %v420 = vunpack.c.l.b16 %v330
        %v421 = vunpack.c.h.b16 %v330
        %v422 = vunpack.c.l.b16 %v331
        %v423 = vunpack.c.h.b16 %v331
        %v424 = vunpack.c.l.b16 %v332
        %v425 = vunpack.c.h.b16 %v332
        %v426 = vunpack.c.l.b16 %v333
        %v427 = vunpack.c.h.b16 %v333
        %v428 = vunpack.c.l.b16 %v334
        %v429 = vunpack.c.h.b16 %v334
        %v430 = vunpack.c.l.b16 %v335
        %v431 = vunpack.c.h.b16 %v335
        %v432 = vunpack.c.l.b16 %v336
        %v433 = vunpack.c.h.b16 %v336
        %v434 = vunpack.c.l.b16 %v337
        %v435 = vunpack.c.h.b16 %v337
        %v436 = vunpack.c.l.b16 %v338
        %v437 = vunpack.c.h.b16 %v338
        %v438 = vunpack.c.l.b16 %v339
        %v439 = vunpack.c.h.b16 %v339
        %v440 = vunpack.c.l.b16 %v340
        %v441 = vunpack.c.h.b16 %v340
        %v442 = vunpack.c.l.b16 %v341
        %v443 = vunpack.c.h.b16 %v341
        %v444 = vunpack.c.l.b16 %v342
        %v445 = vunpack.c.h.b16 %v342
        %v446 = vunpack.c.l.b16 %v343
        %v447 = vunpack.c.h.b16 %v343
        %v448 = vunpack.c.l.b16 %v344
        %v449 = vunpack.c.h.b16 %v344
        %v450 = vunpack.c.l.b16 %v345
        %v451 = vunpack.c.h.b16 %v345
        %v452 = vunpack.c.l.b16 %v346
        %v453 = vunpack.c.h.b16 %v346
        %v454 = vunpack.c.l.b16 %v347
        %v455 = vunpack.c.h.b16 %v347
        %v456 = vunpack.c.l.b16 %v348
        %v457 = vunpack.c.h.b16 %v348
        %v458 = vunpack.c.l.b16 %v349
        %v459 = vunpack.c.h.b16 %v349
        %v460 = vunpack.c.l.b16 %v350
        %v461 = vunpack.c.h.b16 %v350
        %v462 = vunpack.c.l.b16 %v351
        %v463 = vunpack.c.h.b16 %v351
        %v464 = vunpack.c.l.b16 %v352
        %v465 = vunpack.c.h.b16 %v352
        %v466 = vunpack.c.l.b16 %v353
        %v467 = vunpack.c.h.b16 %v353
        %v468 = vunpack.c.l.b16 %v354
        %v469 = vunpack.c.h.b16 %v354
        %v470 = vunpack.c.l.b16 %v355
        %v471 = vunpack.c.h.b16 %v355
        %v472 = vunpack.c.l.b16 %v356
        %v473 = vunpack.c.h.b16 %v356
        %v474 = vunpack.c.l.b16 %v357
        %v475 = vunpack.c.h.b16 %v357
        %v476 = vpack.c.b16 %v416, %v412
        %v477 = vpack.c.b16 %v417, %v413
        %v478 = vpack.c.b16 %v418, %v414
        %v479 = vpack.c.b16 %v419, %v415
        %v480 = vpack.c.b16 %v424, %v420
        %v481 = vpack.c.b16 %v425, %v421
        %v482 = vpack.c.b16 %v426, %v422
        %v483 = vpack.c.b16 %v427, %v423
        %v484 = vpack.c.b16 %v432, %v428
        %v485 = vpack.c.b16 %v433, %v429
        %v486 = vpack.c.b16 %v434, %v430
        %v487 = vpack.c.b16 %v435, %v431
        %v488 = vpack.c.b16 %v440, %v436
        %v489 = vpack.c.b16 %v441, %v437
        %v490 = vpack.c.b16 %v442, %v438
        %v491 = vpack.c.b16 %v443, %v439
        %v492 = vpack.c.b16 %v448, %v444
        %v493 = vpack.c.b16 %v449, %v445
        %v494 = vpack.c.b16 %v450, %v446
        %v495 = vpack.c.b16 %v451, %v447
        %v496 = vpack.c.b16 %v456, %v452
        %v497 = vpack.c.b16 %v457, %v453
        %v498 = vpack.c.b16 %v458, %v454
        %v499 = vpack.c.b16 %v459, %v455
        %v500 = vpack.c.b16 %v464, %v460
        %v501 = vpack.c.b16 %v465, %v461
        %v502 = vpack.c.b16 %v466, %v462
        %v503 = vpack.c.b16 %v467, %v463
        %v504 = vpack.c.b16 %v472, %v468
        %v505 = vpack.c.b16 %v473, %v469
        %v506 = vpack.c.b16 %v474, %v470
        %v507 = vpack.c.b16 %v475, %v471
        %540 = vmatprep.subr.bf16.mxu0 %v477
        %541 = vmatpush1.bf16.msra.mxu0 %v476
        %542 = vmatprep.subr.bf16.mxu0 %v481
        %543 = vmatpush1.bf16.msra.mxu0 %v480
        %544 = vmatprep.subr.bf16.mxu0 %v485
        %545 = vmatpush1.bf16.msra.mxu0 %v484
        %546 = vmatprep.subr.bf16.mxu0 %v489
        %547 = vmatpush1.bf16.msra.mxu0 %v488
        %548 = vmatprep.subr.bf16.mxu0 %v493
        %549 = vmatpush1.bf16.msra.mxu0 %v492
        %550 = vmatprep.subr.bf16.mxu0 %v497
        %551 = vmatpush1.bf16.msra.mxu0 %v496
        %552 = vmatprep.subr.bf16.mxu0 %v501
        %553 = vmatpush1.bf16.msra.mxu0 %v500
        %554 = vmatprep.subr.bf16.mxu0 %v505
        %555 = vmatpush1.bf16.msra.mxu0 %v504
        %556 = vmatprep.subr.bf16.mxu0 0
        %557 = vmatpush1.bf16.msra.mxu0 0
        %558 = vmatprep.subr.bf16.mxu0 0
        %559 = vmatpush1.bf16.msra.mxu0 0
        %560 = vmatprep.subr.bf16.mxu0 0
        %561 = vmatpush1.bf16.msra.mxu0 0
        %562 = vmatprep.subr.bf16.mxu0 0
        %563 = vmatpush1.bf16.msra.mxu0 0
        %564 = vmatprep.subr.bf16.mxu0 0
        %565 = vmatpush1.bf16.msra.mxu0 0
        %566 = vmatprep.subr.bf16.mxu0 0
        %567 = vmatpush1.bf16.msra.mxu0 0
        %568 = vmatprep.subr.bf16.mxu0 0
        %569 = vmatpush1.bf16.msra.mxu0 0
        %570 = vmatprep.subr.bf16.mxu0 0
        %571 = vmatpush1.bf16.msra.mxu0 0
        %572 = vmatprep.mubr.bf16.mxu0 0
        %573 = vmatmul.mubr.bf16.gmra.mrb[0].mxu0 %v325
        %v574 = vpop.f32.mrb[0].mxu0
        %v575 = vadd.f32 %v363, %v574
        %v576 = vpop.f32.mrb[0].mxu0
        %v577 = vadd.f32 %v367, %v576
        %v578 = vpop.f32.mrb[0].mxu0
        %v579 = vpop.f32.mrb[0].mxu0
        %580 = vdwg.mxu0
        %581 = vmatprep.subr.bf16.mxu0 %v479
        %582 = vmatpush1.bf16.msra.mxu0 %v478
        %583 = vmatprep.subr.bf16.mxu0 %v483
        %584 = vmatpush1.bf16.msra.mxu0 %v482
        %585 = vmatprep.subr.bf16.mxu0 %v487
        %586 = vmatpush1.bf16.msra.mxu0 %v486
        %587 = vmatprep.subr.bf16.mxu0 %v491
        %588 = vmatpush1.bf16.msra.mxu0 %v490
        %589 = vmatprep.subr.bf16.mxu0 %v495
        %590 = vmatpush1.bf16.msra.mxu0 %v494
        %591 = vmatprep.subr.bf16.mxu0 %v499
        %592 = vmatpush1.bf16.msra.mxu0 %v498
        %593 = vmatprep.subr.bf16.mxu0 %v503
        %594 = vmatpush1.bf16.msra.mxu0 %v502
        %595 = vmatprep.subr.bf16.mxu0 %v507
        %596 = vmatpush1.bf16.msra.mxu0 %v506
        %597 = vmatprep.subr.bf16.mxu0 0
        %598 = vmatpush1.bf16.msra.mxu0 0
        %599 = vmatprep.subr.bf16.mxu0 0
        %600 = vmatpush1.bf16.msra.mxu0 0
        %601 = vmatprep.subr.bf16.mxu0 0
        %602 = vmatpush1.bf16.msra.mxu0 0
        %603 = vmatprep.subr.bf16.mxu0 0
        %604 = vmatpush1.bf16.msra.mxu0 0
        %605 = vmatprep.subr.bf16.mxu0 0
        %606 = vmatpush1.bf16.msra.mxu0 0
        %607 = vmatprep.subr.bf16.mxu0 0
        %608 = vmatpush1.bf16.msra.mxu0 0
        %609 = vmatprep.subr.bf16.mxu0 0
        %610 = vmatpush1.bf16.msra.mxu0 0
        %611 = vmatprep.subr.bf16.mxu0 0
        %612 = vmatpush1.bf16.msra.mxu0 0
        %613 = vmatprep.mubr.bf16.mxu0 0
        %614 = vmatmul.mubr.bf16.gmra.mrb[0].mxu0 %v325
        %v615 = vpop.f32.mrb[0].mxu0
        %v616 = vadd.f32 %v371, %v615
        %v617 = vpop.f32.mrb[0].mxu0
        %v618 = vadd.f32 %v375, %v617
        %v619 = vpop.f32.mrb[0].mxu0
        %v620 = vpop.f32.mrb[0].mxu0
        %621 = vdwg.mxu0
        %v622 = vmax.f32 %v575, 0.0
        %v623 = vmax.f32 %v577, 0.0
        %v624 = vmax.f32 %v616, 0.0
        %v625 = vmax.f32 %v618, 0.0
        %v626 = vpack.c.bf16 %v622, %v622
        %v627 = vpack.c.bf16 %v623, %v623
        %v628 = vpack.c.bf16 %v624, %v624
        %v629 = vpack.c.bf16 %v625, %v625
        %v630 = vld [vmem:[#allocation7] sm:$0xf]
        %v631 = vld [vmem:[#allocation7 + $0x4] sm:$0xf]
        %v632 = vld [vmem:[#allocation7 + $0x8] sm:$0xf]
        %v633 = vld [vmem:[#allocation7 + $0xc] sm:$0xf]
        %v634 = vld [vmem:[#allocation7 + $0x10] sm:$0xf]
        %v635 = vld [vmem:[#allocation7 + $0x14] sm:$0xf]
        %v636 = vld [vmem:[#allocation7 + $0x18] sm:$0xf]
        %v637 = vld [vmem:[#allocation7 + $0x1c] sm:$0xf]
        %v638 = vld [vmem:[#allocation7 + $0x20] sm:$0xf]
        %v639 = vld [vmem:[#allocation7 + $0x24] sm:$0xf]
        %v640 = vld [vmem:[#allocation7 + $0x28] sm:$0xf]
        %v641 = vld [vmem:[#allocation7 + $0x2c] sm:$0xf]
        %v642 = vld [vmem:[#allocation7 + $0x30] sm:$0xf]
        %v643 = vld [vmem:[#allocation7 + $0x34] sm:$0xf]
        %v644 = vld [vmem:[#allocation7 + $0x38] sm:$0xf]
        %v645 = vld [vmem:[#allocation7 + $0x3c] sm:$0xf]
        %v646 = vld [vmem:[#allocation7 + $0x40] sm:$0xf]
        %v647 = vld [vmem:[#allocation7 + $0x44] sm:$0xf]
        %v648 = vld [vmem:[#allocation7 + $0x48] sm:$0xf]
        %v649 = vld [vmem:[#allocation7 + $0x4c] sm:$0xf]
        %v650 = vld [vmem:[#allocation7 + $0x50] sm:$0xf]
        %v651 = vld [vmem:[#allocation7 + $0x54] sm:$0xf]
        %v652 = vld [vmem:[#allocation7 + $0x58] sm:$0xf]
        %v653 = vld [vmem:[#allocation7 + $0x5c] sm:$0xf]
        %v654 = vld [vmem:[#allocation7 + $0x60] sm:$0xf]
        %v655 = vld [vmem:[#allocation7 + $0x64] sm:$0xf]
        %v656 = vld [vmem:[#allocation7 + $0x68] sm:$0xf]
        %v657 = vld [vmem:[#allocation7 + $0x6c] sm:$0xf]
        %v658 = vld [vmem:[#allocation7 + $0x70] sm:$0xf]
        %v659 = vld [vmem:[#allocation7 + $0x74] sm:$0xf]
        %v660 = vld [vmem:[#allocation7 + $0x78] sm:$0xf]
        %v661 = vld [vmem:[#allocation7 + $0x7c] sm:$0xf]
        %v662 = vld [vmem:[#allocation7 + $0x80] sm:$0xf]
        %v663 = vld [vmem:[#allocation7 + $0x84] sm:$0xf]
        %v664 = vld [vmem:[#allocation7 + $0x88] sm:$0xf]
        %v665 = vld [vmem:[#allocation7 + $0x8c] sm:$0xf]
        %v666 = vld [vmem:[#allocation7 + $0x90] sm:$0xf]
        %v667 = vld [vmem:[#allocation7 + $0x94] sm:$0xf]
        %v668 = vld [vmem:[#allocation7 + $0x98] sm:$0xf]
        %v669 = vld [vmem:[#allocation7 + $0x9c] sm:$0xf]
        %v670 = vld [vmem:[#allocation7 + $0xa0] sm:$0xf]
        %v671 = vld [vmem:[#allocation7 + $0xa4] sm:$0xf]
        %v672 = vld [vmem:[#allocation7 + $0xa8] sm:$0xf]
        %v673 = vld [vmem:[#allocation7 + $0xac] sm:$0xf]
        %v674 = vld [vmem:[#allocation7 + $0xb0] sm:$0xf]
        %v675 = vld [vmem:[#allocation7 + $0xb4] sm:$0xf]
        %v676 = vld [vmem:[#allocation7 + $0xb8] sm:$0xf]
        %v677 = vld [vmem:[#allocation7 + $0xbc] sm:$0xf]
        %v678 = vld [vmem:[#allocation7 + $0xc0] sm:$0xf]
        %v679 = vld [vmem:[#allocation7 + $0xc4] sm:$0xf]
        %v680 = vld [vmem:[#allocation7 + $0xc8] sm:$0xf]
        %v681 = vld [vmem:[#allocation7 + $0xcc] sm:$0xf]
        %v682 = vld [vmem:[#allocation7 + $0xd0] sm:$0xf]
        %v683 = vld [vmem:[#allocation7 + $0xd4] sm:$0xf]
        %v684 = vld [vmem:[#allocation7 + $0xd8] sm:$0xf]
        %v685 = vld [vmem:[#allocation7 + $0xdc] sm:$0xf]
        %v686 = vld [vmem:[#allocation7 + $0xe0] sm:$0xf]
        %v687 = vld [vmem:[#allocation7 + $0xe4] sm:$0xf]
        %v688 = vld [vmem:[#allocation7 + $0xe8] sm:$0xf]
        %v689 = vld [vmem:[#allocation7 + $0xec] sm:$0xf]
        %v690 = vld [vmem:[#allocation7 + $0xf0] sm:$0xf]
        %v691 = vld [vmem:[#allocation7 + $0xf4] sm:$0xf]
        %v692 = vld [vmem:[#allocation7 + $0xf8] sm:$0xf]
        %v693 = vld [vmem:[#allocation7 + $0xfc] sm:$0xf]
        %v758 = vunpack.c.l.b16 %v630
        %v759 = vunpack.c.l.b16 %v631
        %v760 = vunpack.c.l.b16 %v632
        %v761 = vunpack.c.l.b16 %v633
        %v762 = vunpack.c.l.b16 %v634
        %v763 = vunpack.c.l.b16 %v635
        %v764 = vunpack.c.l.b16 %v636
        %v765 = vunpack.c.l.b16 %v637
        %v766 = vunpack.c.l.b16 %v638
        %v767 = vunpack.c.l.b16 %v639
        %v768 = vunpack.c.l.b16 %v640
        %v769 = vunpack.c.l.b16 %v641
        %v770 = vunpack.c.l.b16 %v642
        %v771 = vunpack.c.l.b16 %v643
        %v772 = vunpack.c.l.b16 %v644
        %v773 = vunpack.c.l.b16 %v645
        %v774 = vunpack.c.l.b16 %v646
        %v775 = vunpack.c.l.b16 %v647
        %v776 = vunpack.c.l.b16 %v648
        %v777 = vunpack.c.l.b16 %v649
        %v778 = vunpack.c.l.b16 %v650
        %v779 = vunpack.c.l.b16 %v651
        %v780 = vunpack.c.l.b16 %v652
        %v781 = vunpack.c.l.b16 %v653
        %v782 = vunpack.c.l.b16 %v654
        %v783 = vunpack.c.l.b16 %v655
        %v784 = vunpack.c.l.b16 %v656
        %v785 = vunpack.c.l.b16 %v657
        %v786 = vunpack.c.l.b16 %v658
        %v787 = vunpack.c.l.b16 %v659
        %v788 = vunpack.c.l.b16 %v660
        %v789 = vunpack.c.l.b16 %v661
        %v790 = vunpack.c.l.b16 %v662
        %v791 = vunpack.c.l.b16 %v663
        %v792 = vunpack.c.l.b16 %v664
        %v793 = vunpack.c.l.b16 %v665
        %v794 = vunpack.c.l.b16 %v666
        %v795 = vunpack.c.l.b16 %v667
        %v796 = vunpack.c.l.b16 %v668
        %v797 = vunpack.c.l.b16 %v669
        %v798 = vunpack.c.l.b16 %v670
        %v799 = vunpack.c.l.b16 %v671
        %v800 = vunpack.c.l.b16 %v672
        %v801 = vunpack.c.l.b16 %v673
        %v802 = vunpack.c.l.b16 %v674
        %v803 = vunpack.c.l.b16 %v675
        %v804 = vunpack.c.l.b16 %v676
        %v805 = vunpack.c.l.b16 %v677
        %v806 = vunpack.c.l.b16 %v678
        %v807 = vunpack.c.l.b16 %v679
        %v808 = vunpack.c.l.b16 %v680
        %v809 = vunpack.c.l.b16 %v681
        %v810 = vunpack.c.l.b16 %v682
        %v811 = vunpack.c.l.b16 %v683
        %v812 = vunpack.c.l.b16 %v684
        %v813 = vunpack.c.l.b16 %v685
        %v814 = vunpack.c.l.b16 %v686
        %v815 = vunpack.c.l.b16 %v687
        %v816 = vunpack.c.l.b16 %v688
        %v817 = vunpack.c.l.b16 %v689
        %v818 = vunpack.c.l.b16 %v690
        %v819 = vunpack.c.l.b16 %v691
        %v820 = vunpack.c.l.b16 %v692
        %v821 = vunpack.c.l.b16 %v693
        %v822 = vpack.c.b16 %v759, %v758
        %v823 = vpack.c.b16 %v761, %v760
        %v824 = vpack.c.b16 %v763, %v762
        %v825 = vpack.c.b16 %v765, %v764
        %v826 = vpack.c.b16 %v767, %v766
        %v827 = vpack.c.b16 %v769, %v768
        %v828 = vpack.c.b16 %v771, %v770
        %v829 = vpack.c.b16 %v773, %v772
        %v830 = vpack.c.b16 %v775, %v774
        %v831 = vpack.c.b16 %v777, %v776
        %v832 = vpack.c.b16 %v779, %v778
        %v833 = vpack.c.b16 %v781, %v780
        %v834 = vpack.c.b16 %v783, %v782
        %v835 = vpack.c.b16 %v785, %v784
        %v836 = vpack.c.b16 %v787, %v786
        %v837 = vpack.c.b16 %v789, %v788
        %v838 = vpack.c.b16 %v791, %v790
        %v839 = vpack.c.b16 %v793, %v792
        %v840 = vpack.c.b16 %v795, %v794
        %v841 = vpack.c.b16 %v797, %v796
        %v842 = vpack.c.b16 %v799, %v798
        %v843 = vpack.c.b16 %v801, %v800
        %v844 = vpack.c.b16 %v803, %v802
        %v845 = vpack.c.b16 %v805, %v804
        %v846 = vpack.c.b16 %v807, %v806
        %v847 = vpack.c.b16 %v809, %v808
        %v848 = vpack.c.b16 %v811, %v810
        %v849 = vpack.c.b16 %v813, %v812
        %v850 = vpack.c.b16 %v815, %v814
        %v851 = vpack.c.b16 %v817, %v816
        %v852 = vpack.c.b16 %v819, %v818
        %v853 = vpack.c.b16 %v821, %v820
        %886 = vmatprep.subr.bf16.mxu0 0
        %887 = vmatpush1.bf16.msra.mxu0 %v822
        %888 = vmatprep.subr.bf16.mxu0 0
        %889 = vmatpush1.bf16.msra.mxu0 %v823
        %890 = vmatprep.subr.bf16.mxu0 0
        %891 = vmatpush1.bf16.msra.mxu0 %v824
        %892 = vmatprep.subr.bf16.mxu0 0
        %893 = vmatpush1.bf16.msra.mxu0 %v825
        %894 = vmatprep.subr.bf16.mxu0 0
        %895 = vmatpush1.bf16.msra.mxu0 %v826
        %896 = vmatprep.subr.bf16.mxu0 0
        %897 = vmatpush1.bf16.msra.mxu0 %v827
        %898 = vmatprep.subr.bf16.mxu0 0
        %899 = vmatpush1.bf16.msra.mxu0 %v828
        %900 = vmatprep.subr.bf16.mxu0 0
        %901 = vmatpush1.bf16.msra.mxu0 %v829
        %902 = vmatprep.subr.bf16.mxu0 0
        %903 = vmatpush1.bf16.msra.mxu0 %v830
        %904 = vmatprep.subr.bf16.mxu0 0
        %905 = vmatpush1.bf16.msra.mxu0 %v831
        %906 = vmatprep.subr.bf16.mxu0 0
        %907 = vmatpush1.bf16.msra.mxu0 %v832
        %908 = vmatprep.subr.bf16.mxu0 0
        %909 = vmatpush1.bf16.msra.mxu0 %v833
        %910 = vmatprep.subr.bf16.mxu0 0
        %911 = vmatpush1.bf16.msra.mxu0 %v834
        %912 = vmatprep.subr.bf16.mxu0 0
        %913 = vmatpush1.bf16.msra.mxu0 %v835
        %914 = vmatprep.subr.bf16.mxu0 0
        %915 = vmatpush1.bf16.msra.mxu0 %v836
        %916 = vmatprep.subr.bf16.mxu0 0
        %917 = vmatpush1.bf16.msra.mxu0 %v837
        %918 = vmatprep.mubr.bf16.mxu0 %v627
        %919 = vmatmul.mubr.bf16.gmra.mrb[0].mxu0 %v626
        %v920 = vpop.f32.mrb[0].mxu0
        %v921 = vadd.f32 0.0, %v920
        %v922 = vpop.f32.mrb[0].mxu0
        %v923 = vpop.f32.mrb[0].mxu0
        %v924 = vpop.f32.mrb[0].mxu0
        %925 = vdwg.mxu0
        %926 = vmatprep.subr.bf16.mxu0 0
        %927 = vmatpush1.bf16.msra.mxu0 %v838
        %928 = vmatprep.subr.bf16.mxu0 0
        %929 = vmatpush1.bf16.msra.mxu0 %v839
        %930 = vmatprep.subr.bf16.mxu0 0
        %931 = vmatpush1.bf16.msra.mxu0 %v840
        %932 = vmatprep.subr.bf16.mxu0 0
        %933 = vmatpush1.bf16.msra.mxu0 %v841
        %934 = vmatprep.subr.bf16.mxu0 0
        %935 = vmatpush1.bf16.msra.mxu0 %v842
        %936 = vmatprep.subr.bf16.mxu0 0
        %937 = vmatpush1.bf16.msra.mxu0 %v843
        %938 = vmatprep.subr.bf16.mxu0 0
        %939 = vmatpush1.bf16.msra.mxu0 %v844
        %940 = vmatprep.subr.bf16.mxu0 0
        %941 = vmatpush1.bf16.msra.mxu0 %v845
        %942 = vmatprep.subr.bf16.mxu0 0
        %943 = vmatpush1.bf16.msra.mxu0 %v846
        %944 = vmatprep.subr.bf16.mxu0 0
        %945 = vmatpush1.bf16.msra.mxu0 %v847
        %946 = vmatprep.subr.bf16.mxu0 0
        %947 = vmatpush1.bf16.msra.mxu0 %v848
        %948 = vmatprep.subr.bf16.mxu0 0
        %949 = vmatpush1.bf16.msra.mxu0 %v849
        %950 = vmatprep.subr.bf16.mxu0 0
        %951 = vmatpush1.bf16.msra.mxu0 %v850
        %952 = vmatprep.subr.bf16.mxu0 0
        %953 = vmatpush1.bf16.msra.mxu0 %v851
        %954 = vmatprep.subr.bf16.mxu0 0
        %955 = vmatpush1.bf16.msra.mxu0 %v852
        %956 = vmatprep.subr.bf16.mxu0 0
        %957 = vmatpush1.bf16.msra.mxu0 %v853
        %958 = vmatprep.mubr.bf16.mxu0 %v629
        %959 = vmatmul.mubr.bf16.gmra.mrb[0].mxu0 %v628
        %v960 = vpop.f32.mrb[0].mxu0
        %v961 = vadd.f32 %v921, %v960
        %v962 = vpop.f32.mrb[0].mxu0
        %v963 = vpop.f32.mrb[0].mxu0
        %v964 = vpop.f32.mrb[0].mxu0
        %965 = vdwg.mxu0
        %v966 = vld [vmem:[%s4] sm:$0x1]
        %v967 = vld [vmem:[%s5] sm:$0x1]
        %v968 = vld [vmem:[%s6] sm:$0x1]
        %v969 = vadd.f32 %v324, %v961
        %v971 = vlaneseq
        %v972 = vshrl.u32 %v971, 7
        %v973 = vsub.s32 0, %v972
        %v974 = vrot.slane %v966, %v973
        %v976 = vadd.f32 %v969, %v974
        %977 = vadd.xlane.f32.xlu0 %v976
        %v978 = vpop.xlane.xlu0 %977
        %v979 = vrcp.pop 128.0
        %v980 = vmul.f32 %v978, %v979
        %v981 = vsub.f32 %v976, %v980
        %v982 = vmul.f32 %v981, %v981
        %983 = vadd.xlane.f32.xlu0 %v982
        %v984 = vpop.xlane.xlu0 %983
        %v985 = vmul.f32 %v984, %v979
        %v986 = vadd.f32 %v985, 1e-05
        %v987 = vrsqrt.pop %v986
        %v989 = vlaneseq
        %v990 = vshrl.u32 %v989, 7
        %v991 = vsub.s32 0, %v990
        %v992 = vrot.slane %v967, %v991
        %v994 = vmul.f32 %v987, %v992
        %v995 = vmul.f32 %v981, %v994
        %v997 = vlaneseq
        %v998 = vshrl.u32 %v997, 7
        %v999 = vsub.s32 0, %v998
        %v1000 = vrot.slane %v968, %v999
        %v1002 = vadd.f32 %v995, %v1000
        %1003 = vst [vmem:[%s322] sm:$0xff] %v1002
        %s1004 = sand.u32 %s185, 1
        %s1005 = scalar_lea.sflag [#allocation4], %s1004
        %s1006 = sand.u32 %s185, 1
        %s1007 = smul.addr %s1006, 8
        %s1008 = scalar_lea.vmem [#allocation8], %s1007
        // Predicated region
        $region61: #{tpu_custom_call.1} parent=47 // pred_check
          %p1009 = pneg %p195
        $region62: #{tpu_custom_call.1} parent=47 // pred_check_branch
          %1011 = sbr.rel (%p1009) target = $region64
        $region63: #{tpu_custom_call.1} parent=47 // pred_region
          %s1013 = ssub.s32 128, 128
          %1014 = vsyncadd %s1005, %s1013
          %s1015 = smul.addr %s25, 128
          %s1016 = scalar_lea.hbm %s7, %s1015
          %s1018 = sshll.u32 %s1008, 4
          %s1019 = int_to_ptr.vmem [resolvable:$true] %s1018
          %1021 = dma.vmem_to_hbm [thread:$0]  %s1019, 128, %s1016, %s1005
        $region64: #{tpu_custom_call.1} parent=47 // pred_fallthru
          _
      $region48: #{tpu_custom_call.1} parent=5 // pred_fallthru
        _
      %p1022 = scmp.le.s32.totalorder 2, %s20
      // Predicated region
      $region65: #{tpu_custom_call.1} parent=5 // pred_check
        %p1023 = pneg %p1022
      $region66: #{tpu_custom_call.1} parent=5 // pred_check_branch
        %1025 = sbr.rel (%p1023) target = $region68
      $region67: #{tpu_custom_call.1} parent=5 // pred_region
        %s1026 = ssub.s32 %s20, 2
        // Predicated region
        $region69: #{tpu_custom_call.1} parent=67 // pred_check
          %p1027 = pneg %p201
        $region70: #{tpu_custom_call.1} parent=67 // pred_check_branch
          %1029 = sbr.rel (%p1027) target = $region72
        $region71: #{tpu_custom_call.1} parent=67 // pred_region
          %s1030 = sand.u32 %s186, 1
          %s1031 = scalar_lea.sflag [#allocation4], %s1030
          %s1032 = sand.u32 %s186, 1
          %s1033 = smul.addr %s1032, 8
          %s1034 = scalar_lea.vmem [#allocation8], %s1033
          %1035 = dma.done %s1031, 128
        $region72: #{tpu_custom_call.1} parent=67 // pred_fallthru
          _
      $region68: #{tpu_custom_call.1} parent=5 // pred_fallthru
        _
    $region6: #{tpu_custom_call.1} parent=1 // loop_footer
      %s24 = sadd.s32 1, %s20
    $region7: #{tpu_custom_call.1} parent=1 // loop_footer_branch
      %19 = sbr.rel target = $region3
    $region8: #{tpu_custom_call.1} parent=1 // loop_exit
      _
    %1036 = vsyncpa [#allocation3], 1
    %s1037 = scalar_lea.sflag [#allocation3], 1
    %1038 = vsyncpa %s1037, 1
    %1039 = vsyncpa [#allocation6], 1
    %1040 = vsyncpa [#allocation4], 1
    %s1041 = scalar_lea.sflag [#allocation4], 1
    %1042 = vsyncpa %s1041, 1

</llo_original>
